<compile_context>
chip_gen: v7x
topology: tpu7x:2x2x1
jax: 0.10.0
libtpu: 0.0.40
codegen_flags: <defaults>
</compile_context>

<pallas_src>
import functools

import jax
import jax.numpy as jnp
from jax.experimental import pallas as pl
from jax.experimental.pallas import tpu as pltpu

_LANES = 1024            # lane-dense last dim (large multiple of 128)
_MAX_BLOCK_ROWS = 1024   # 1024 x 1024 f32 tile = 4 MiB; in+out double-buffered ~16 MiB
_VMEM_LIMIT_BYTES = 32 * 1024 * 1024


def _relu2_kernel(x_ref, o_ref, *, order: int):
    x = x_ref[...]
    if order == 0:
        # relu(x) ** 0 == 1 (torch.pow returns 1 even at 0**0)
        o_ref[...] = jnp.ones_like(x)
        return
    r = jnp.maximum(x, jnp.zeros_like(x))
    y = r
    for _ in range(order - 1):   # order is a static Python int
        y = y * r
    o_ref[...] = y.astype(o_ref.dtype)


def relu2_forward(x: jax.Array, order: int = 2, *, _block_rows: int | None = None) -> jax.Array:
    """relu(x) ** order computed in a tiled, lane-dense Pallas kernel."""
    orig_shape = x.shape
    orig_dtype = x.dtype
    total = x.size
    if total == 0:
        return x

    flat = x.reshape(-1)

    # Repack to (rows, _LANES) so the last dim is a big multiple of 128.
    lanes = _LANES
    rows = pl.cdiv(total, lanes)
    padded_total = rows * lanes
    if padded_total != total:
        # relu(0)**k pad values are harmless and sliced off below.
        flat = jnp.pad(flat, (0, padded_total - total))
    x2d = flat.reshape(rows, lanes)

    if _block_rows is not None:
        block_rows = min(_block_rows, rows)
    elif rows <= _MAX_BLOCK_ROWS:
        block_rows = rows            # single full-dim block (exempt from 8x128 tiling rule)
    else:
        block_rows = _MAX_BLOCK_ROWS  # multiple of 8/16/32 -> legal for all dtypes
    grid = (pl.cdiv(rows, block_rows),)   # last block may be partial; Pallas masks OOB writes

    kernel = functools.partial(_relu2_kernel, order=order)

    out2d = pl.pallas_call(
        kernel,
        out_shape=jax.ShapeDtypeStruct((rows, lanes), orig_dtype),
        grid=grid,
        in_specs=[pl.BlockSpec((block_rows, lanes), lambda i: (i, 0))],
        out_specs=pl.BlockSpec((block_rows, lanes), lambda i: (i, 0)),
        compiler_params=pltpu.CompilerParams(
            dimension_semantics=("parallel",),
            vmem_limit_bytes=_VMEM_LIMIT_BYTES,
        ),
    )(x2d)

    out = out2d.reshape(-1)
    if padded_total != total:
        out = out[:total]
    return out.reshape(orig_shape)


class Relu2:
    """JAX mirror of the PyTorch relu2 module."""

    def __init__(self, order: int = 2):
        # nn.Parameter(torch.ones(1)) — deterministic init; unused in forward
        # (matches the PyTorch module, where `a` never appears in forward()).
        self.a = jnp.ones((1,), dtype=jnp.float32)
        self.order = order

    def __call__(self, x):
        return relu2_forward(x, order=self.order)


if __name__ == "__main__":
    key = jax.random.PRNGKey(0)
    model = Relu2(order=2)

    # 1) Small NCHW input consistent with an activation module (divides lanes).
    x = jax.random.normal(key, (2, 4, 16, 16), dtype=jnp.float32)
    y = jax.block_until_ready(model(x))
    ref = jnp.maximum(x, 0.0) ** 2
    assert y.shape == x.shape and y.dtype == x.dtype
    assert jnp.allclose(y, ref, atol=1e-6, rtol=1e-6)

    # 2) Padding / non-multiple-of-1024 path.
    x2 = jax.random.normal(jax.random.PRNGKey(1), (2, 3, 5, 7), dtype=jnp.float32)
    y2 = jax.block_until_ready(model(x2))
    ref2 = jnp.maximum(x2, 0.0) ** 2
    assert y2.shape == x2.shape and y2.dtype == x2.dtype
    assert jnp.allclose(y2, ref2, atol=1e-6, rtol=1e-6)

    # 3) Multi-block grid with a partially-masked last block (block override keeps it small).
    x3 = jax.random.normal(jax.random.PRNGKey(2), (2, 4, 100, 128), dtype=jnp.float32)
    y3 = jax.block_until_ready(relu2_forward(x3, order=2, _block_rows=64))
    ref3 = jnp.maximum(x3, 0.0) ** 2
    assert y3.shape == x3.shape and y3.dtype == x3.dtype
    assert jnp.allclose(y3, ref3, atol=1e-6, rtol=1e-6)

    # 4) bf16 dtype path.
    x4 = jax.random.normal(jax.random.PRNGKey(3), (2, 4, 16, 16), dtype=jnp.bfloat16)
    y4 = jax.block_until_ready(model(x4))
    ref4 = jnp.maximum(x4, jnp.bfloat16(0)) ** 2
    assert y4.shape == x4.shape and y4.dtype == x4.dtype
    assert jnp.allclose(y4.astype(jnp.float32), ref4.astype(jnp.float32), atol=1e-2, rtol=1e-2)

    print("KERNEL_OK")
</pallas_src>

<mosaic_0001>
module attributes {stable_mosaic.version = 11 : i64} {
  func.func @_relu2_kernel(%arg0: i32, %arg1: memref<2x1024xf32, #tpu.memory_space<vmem>>, %arg2: memref<2x1024xf32, #tpu.memory_space<vmem>>) attributes {dimension_semantics = [#tpu.dimension_semantics<parallel>], iteration_bounds = array<i64: 1>, scalar_prefetch = 0 : i64, scratch_operands = 0 : i64, tpu.core_type = #tpu.core_type<tc>, window_params = [{transform_indices = @transform_0, window_bounds = array<i64: 2, 1024>}, {transform_indices = @transform_1, window_bounds = array<i64: 2, 1024>}]} {
    %c0 = arith.constant 0 : index
    %c0_0 = arith.constant 0 : index
    %0 = vector.load %arg1[%c0, %c0_0] : memref<2x1024xf32, #tpu.memory_space<vmem>>, vector<2x1024xf32>
    %cst = arith.constant 0.000000e+00 : f32
    %1 = vector.broadcast %cst : f32 to vector<2x1024xf32>
    %2 = arith.maximumf %0, %1 : vector<2x1024xf32>
    %3 = arith.mulf %2, %2 : vector<2x1024xf32>
    %c0_1 = arith.constant 0 : index
    %c0_2 = arith.constant 0 : index
    %4 = vector.load %arg2[%c0_1, %c0_2] : memref<2x1024xf32, #tpu.memory_space<vmem>>, vector<2x1024xf32>
    tpu.vector_store %arg2[%c0_1, %c0_2], %3 {strides = array<i32>} : memref<2x1024xf32, #tpu.memory_space<vmem>>, vector<2x1024xf32>,
    return
  }
  func.func @transform_0(%arg0: i32) -> (i32, i32) {
    %c0_i32 = arith.constant 0 : i32
    %c0_i32_0 = arith.constant 0 : i32
    return %arg0, %c0_i32 : i32, i32
  }
  func.func @transform_1(%arg0: i32) -> (i32, i32) {
    %c0_i32 = arith.constant 0 : i32
    %c0_i32_0 = arith.constant 0 : i32
    return %arg0, %c0_i32 : i32, i32
  }
}

</mosaic_0001>

<llo_original>
// kernel: tpu_custom_call.1
$region0: #{tpu_custom_call.1}
  #allocation0 [shape = 'u32[]', space=smem, size = 0x4, offset = 0x4, fixed_abs, tag = 'smem constant byte address 0x4 - core index']
  #allocation1 [shape = 'u32[144,128]{1,0:T(1,128)}', space=vmem, size = 0x12000, scoped, tag = 'internal scratch']
  %s0 = inlined_call_operand.hbm [shape: f32[2,1024], index: 0, kind: input, shape index: {}]
  %s1 = inlined_call_operand.hbm [shape: f32[2,1024], index: 1, kind: output, shape index: {}]
  %s2 = sld [smem:[#allocation0]]
  $region18: #{tpu_custom_call.1} parent=0
    _
  %s4 = ssub.s32 1, %s2
  %s5 = scalar_select 0, %s4, %s2
  $region1: #{tpu_custom_call.1} parent=0
    #allocation2 [shape = 'u8[8192]{0}', space=vmem, size = 0x2000, scoped, tag = 'input window, operand 0, single buffered']
    #allocation3 [shape = 's32[1]{0}', space=sflag, size = 0x4, scoped, tag = 'scoped memory for tpu_custom_call.1']
    #allocation4 [shape = 's32[1]{0}', space=sflag, size = 0x4, scoped, tag = 'scoped memory for tpu_custom_call.1']
    #allocation5 [shape = 'u8[8192]{0}', space=vmem, size = 0x2000, scoped, tag = 'output window, operand 0, single buffered']
    %6 = vsyncpa [#allocation3], 0
    %7 = vsyncpa [#allocation4], 0
    // Predicated region
    $region2: #{tpu_custom_call.1} parent=1 // pred_check
      _
    $region3: #{tpu_custom_call.1} parent=1 // pred_check_branch
      %9 = sbr.rel (0) target = $region5
    $region4: #{tpu_custom_call.1} parent=1 // pred_region
      %s11 = ssub.s32 256, 256
      %12 = vsyncadd [#allocation3], %s11
      %s14 = sshll.u32 [#allocation2], 4
      %s15 = int_to_ptr.vmem [resolvable:$true] %s14
      %17 = dma.hbm_to_vmem [thread:$0]  %s0, 256, %s15, [#allocation3]
    $region5: #{tpu_custom_call.1} parent=1 // pred_fallthru
      _
    // Predicated region
    $region6: #{tpu_custom_call.1} parent=1 // pred_check
      _
    $region7: #{tpu_custom_call.1} parent=1 // pred_check_branch
      %19 = sbr.rel (0) target = $region9
    $region8: #{tpu_custom_call.1} parent=1 // pred_region
      %20 = dma.done [#allocation3], 256
    $region9: #{tpu_custom_call.1} parent=1 // pred_fallthru
      _
    %v21 = vld [vmem:[#allocation2] sm:$0xff]
    %v22 = vld [vmem:[#allocation2 + $0x8] sm:$0xff]
    %v23 = vmax.f32 %v21, 0.0
    %v24 = vmax.f32 %v22, 0.0
    %v25 = vmul.f32 %v23, %v23
    %v26 = vmul.f32 %v24, %v24
    %27 = vst [vmem:[#allocation5] sm:$0xff] %v25
    %28 = vst [vmem:[#allocation5 + $0x8] sm:$0xff] %v26
    // Predicated region
    $region10: #{tpu_custom_call.1} parent=1 // pred_check
      _
    $region11: #{tpu_custom_call.1} parent=1 // pred_check_branch
      %30 = sbr.rel (0) target = $region13
    $region12: #{tpu_custom_call.1} parent=1 // pred_region
      %s32 = ssub.s32 256, 256
      %33 = vsyncadd [#allocation4], %s32
      %s35 = sshll.u32 [#allocation5], 4
      %s36 = int_to_ptr.vmem [resolvable:$true] %s35
      %38 = dma.vmem_to_hbm [thread:$0]  %s36, 256, %s1, [#allocation4]
    $region13: #{tpu_custom_call.1} parent=1 // pred_fallthru
      _
    // Predicated region
    $region14: #{tpu_custom_call.1} parent=1 // pred_check
      _
    $region15: #{tpu_custom_call.1} parent=1 // pred_check_branch
      %40 = sbr.rel (0) target = $region17
    $region16: #{tpu_custom_call.1} parent=1 // pred_region
      %41 = dma.done [#allocation4], 256
    $region17: #{tpu_custom_call.1} parent=1 // pred_fallthru
      _
    %42 = vsyncpa [#allocation3], 1
    %43 = vsyncpa [#allocation4], 1

</llo_original>
